<compile_context>
chip_gen: v7x
topology: tpu7x:2x2x1
jax: 0.10.0
libtpu: 0.0.40
codegen_flags: <defaults>
</compile_context>

<pallas_src>
import jax
import jax.numpy as jnp
from jax.experimental import pallas as pl
from jax.experimental.pallas import tpu as pltpu

_LANES = 128


def _make_con_proximity_kernel(num_classes: int, batch_size: int,
                               tile_b: int, needs_tail_mask: bool):
    nc_f = float(num_classes)

    def kernel(x_ref, c01_ref, lab_ref, out_ref):
        i = pl.program_id(0)

        # Cast to f32 inside the kernel (v5e VPU has no bf16 math; keeps the
        # HBM stream at the input's native width).
        x = x_ref[...].astype(jnp.float32)              # (TB, D)
        c0 = c01_ref[0:1, :].astype(jnp.float32)        # (1, D)
        c1 = c01_ref[1:2, :].astype(jnp.float32)        # (1, D)

        # Squared distances to centers 0 and 1 only (direct (x - c)^2 form on
        # the VPU; the 0/1 gather in the reference never reads other columns).
        d0 = jnp.sum(jnp.square(x - c0), axis=1, keepdims=True)   # (TB, 1)
        d1 = jnp.sum(jnp.square(x - c1), axis=1, keepdims=True)   # (TB, 1)
        d0 = jnp.clip(d0, 1e-12, 1e12)
        d1 = jnp.clip(d1, 1e-12, 1e12)

        lab = lab_ref[...]                                         # (TB, 1) i32
        # w0 = #columns gathering distmat[:, 0] (1 iff the label hits a real
        # class; preserves the out-of-range-label edge case), C - w0 gather
        # distmat[:, 1].
        w0 = jnp.logical_and(lab >= 0, lab < num_classes).astype(jnp.float32)
        vals = w0 * d0 + (nc_f - w0) * d1                          # (TB, 1)

        def write(partial):
            # Lane-dense, unmasked (1,1,128) store; final reduce is outside.
            out_ref[...] = jnp.full((1, 1, _LANES), partial, jnp.float32)

        if not needs_tail_mask:
            write(jnp.sum(vals))
        else:
            last = pl.num_programs(0) - 1

            @pl.when(i != last)
            def _full_tile():
                write(jnp.sum(vals))

            @pl.when(i == last)
            def _tail_tile():
                # Tail rows past B are unspecified garbage (no host padding),
                # so select them to zero rather than multiply (0*NaN == NaN).
                row = (jax.lax.broadcasted_iota(jnp.int32, (tile_b, 1), 0)
                       + i * tile_b)
                write(jnp.sum(jnp.where(row < batch_size, vals, 0.0)))

    return kernel


def con_proximity_loss(x, centers, labels, *,
                       target_tile_bytes=2 * 1024 * 1024):
    """x: [B, feat_dim] (any float dtype), centers: [C, feat_dim], labels: [B] int."""
    B, D = x.shape
    C = centers.shape[0]

    # Only the first two centers are ever read by the 0/1 column gather.
    # C == 1 is ill-defined in the reference (index 1 is out of bounds on a
    # width-1 distmat); we mirror "d1 := d0" there.
    if C >= 2:
        c01 = centers[0:2]
    else:
        c01 = jnp.broadcast_to(centers, (2, D))

    labels2d = labels.astype(jnp.int32).reshape(B, 1)

    # Batch tile sized so each x tile is ~target_tile_bytes; multiple of 8
    # sublanes.  Double-buffered footprint stays well below the v7x 64 MiB
    # physical / 32 MiB default-scoped VMEM budget.
    itemsize = jnp.dtype(x.dtype).itemsize
    tb = max(8, ((target_tile_bytes // max(1, D * itemsize)) // 8) * 8)
    if B <= tb:
        tb = B                              # full-extent block, no tail
    num_tiles = int(pl.cdiv(B, tb))
    needs_tail_mask = (B % tb) != 0

    kernel = _make_con_proximity_kernel(C, B, tb, needs_tail_mask)

    out = pl.pallas_call(
        kernel,
        out_shape=jax.ShapeDtypeStruct((num_tiles, 1, _LANES), jnp.float32),
        grid=(num_tiles,),
        in_specs=[
            # x streamed in native dtype; last block may run past B (masked).
            pl.BlockSpec((tb, D), lambda i: (i, 0)),
            pl.BlockSpec((2, D), lambda i: (0, 0)),
            pl.BlockSpec((tb, 1), lambda i: (i, 0)),
        ],
        out_specs=pl.BlockSpec((1, 1, _LANES), lambda i: (i, 0, 0)),
        compiler_params=pltpu.CompilerParams(
            dimension_semantics=("parallel",),   # batch tiles are independent
            vmem_limit_bytes=32 * 1024 * 1024,
        ),
    )(x, c01, labels2d)

    # Tiny final reduction + mean denominator outside the kernel.
    return jnp.sum(out[:, 0, 0]) / float(B * C)


def _ref_loss(x, centers, labels):
    # Pure-JAX reference mirroring the PyTorch forward (incl. the 0/1 gather).
    diff = x[:, None, :].astype(jnp.float32) - centers[None, :, :].astype(jnp.float32)
    distmat = jnp.linalg.norm(diff, axis=2) ** 2
    C = centers.shape[0]
    kk = (labels[:, None] != jnp.arange(C)[None, :]).astype(jnp.int32)  # 0 at label class
    value = jnp.take_along_axis(distmat, kk, axis=1)
    value = jnp.clip(value, 1e-12, 1e12)
    return value.mean()


if __name__ == "__main__":
    num_classes, feat_dim, batch = 10, 32, 4

    key = jax.random.PRNGKey(0)
    kx, kc, kl = jax.random.split(key, 3)
    x = jax.random.normal(kx, (batch, feat_dim), dtype=jnp.float32)
    # Deterministic synthetic parameter (torch.randn(num_classes, feat_dim) analogue).
    centers = jax.random.normal(kc, (num_classes, feat_dim), dtype=jnp.float32)
    labels = jax.random.randint(kl, (batch,), 0, num_classes, dtype=jnp.int32)

    loss = con_proximity_loss(x, centers, labels)
    loss = jax.block_until_ready(loss)

    expected = _ref_loss(x, centers, labels)
    assert jnp.allclose(loss, expected, rtol=1e-3, atol=1e-3), (loss, expected)
    print("KERNEL_OK")
</pallas_src>

<mosaic_0001>
module attributes {stable_mosaic.version = 11 : i64} {
  func.func @kernel(%arg0: i32, %arg1: memref<4x32xf32, #tpu.memory_space<vmem>>, %arg2: memref<2x32xf32, #tpu.memory_space<vmem>>, %arg3: memref<4x1xi32, #tpu.memory_space<vmem>>, %arg4: memref<1x1x128xf32, #tpu.memory_space<vmem>>) attributes {dimension_semantics = [#tpu.dimension_semantics<parallel>], iteration_bounds = array<i64: 1>, scalar_prefetch = 0 : i64, scratch_operands = 0 : i64, tpu.core_type = #tpu.core_type<tc>, window_params = [{transform_indices = @transform_0, window_bounds = array<i64: 4, 32>}, {pipeline_mode = #tpu.pipeline_mode<synchronous>, transform_indices = @transform_1, window_bounds = array<i64: 2, 32>}, {transform_indices = @transform_2, window_bounds = array<i64: 4, 1>}, {transform_indices = @transform_3, window_bounds = array<i64: 1, 1, 128>}]} {
    %c0 = arith.constant 0 : index
    %c0_0 = arith.constant 0 : index
    %0 = vector.load %arg1[%c0, %c0_0] : memref<4x32xf32, #tpu.memory_space<vmem>>, vector<4x32xf32>
    %c0_1 = arith.constant 0 : index
    %c0_2 = arith.constant 0 : index
    %1 = vector.load %arg2[%c0_1, %c0_2] : memref<2x32xf32, #tpu.memory_space<vmem>>, vector<1x32xf32>
    %c1 = arith.constant 1 : index
    %c0_3 = arith.constant 0 : index
    %2 = vector.load %arg2[%c1, %c0_3] : memref<2x32xf32, #tpu.memory_space<vmem>>, vector<1x32xf32>
    %3 = vector.broadcast %1 : vector<1x32xf32> to vector<4x32xf32>
    %4 = arith.subf %0, %3 : vector<4x32xf32>
    %5 = arith.mulf %4, %4 : vector<4x32xf32>
    %cst = arith.constant dense<0.000000e+00> : vector<4xf32>
    %6 = vector.multi_reduction <add>, %5, %cst [1] : vector<4x32xf32> to vector<4xf32>
    %7 = vector.shape_cast %6 : vector<4xf32> to vector<4x1xf32>
    %8 = vector.broadcast %2 : vector<1x32xf32> to vector<4x32xf32>
    %9 = arith.subf %0, %8 : vector<4x32xf32>
    %10 = arith.mulf %9, %9 : vector<4x32xf32>
    %cst_4 = arith.constant dense<0.000000e+00> : vector<4xf32>
    %11 = vector.multi_reduction <add>, %10, %cst_4 [1] : vector<4x32xf32> to vector<4xf32>
    %12 = vector.shape_cast %11 : vector<4xf32> to vector<4x1xf32>
    %cst_5 = arith.constant 9.99999996E-13 : f32
    %cst_6 = arith.constant 9.99999995E+11 : f32
    %13 = vector.broadcast %cst_5 : f32 to vector<4x1xf32>
    %14 = arith.maximumf %13, %7 : vector<4x1xf32>
    %15 = vector.broadcast %cst_6 : f32 to vector<4x1xf32>
    %16 = arith.minimumf %15, %14 : vector<4x1xf32>
    %cst_7 = arith.constant 9.99999996E-13 : f32
    %cst_8 = arith.constant 9.99999995E+11 : f32
    %17 = vector.broadcast %cst_7 : f32 to vector<4x1xf32>
    %18 = arith.maximumf %17, %12 : vector<4x1xf32>
    %19 = vector.broadcast %cst_8 : f32 to vector<4x1xf32>
    %20 = arith.minimumf %19, %18 : vector<4x1xf32>
    %c0_9 = arith.constant 0 : index
    %c0_10 = arith.constant 0 : index
    %21 = vector.load %arg3[%c0_9, %c0_10] : memref<4x1xi32, #tpu.memory_space<vmem>>, vector<4x1xi32>
    %c0_i32 = arith.constant 0 : i32
    %22 = vector.broadcast %c0_i32 : i32 to vector<4x1xi32>
    %23 = arith.cmpi sge, %21, %22 : vector<4x1xi32>
    %c10_i32 = arith.constant 10 : i32
    %24 = vector.broadcast %c10_i32 : i32 to vector<4x1xi32>
    %25 = arith.cmpi slt, %21, %24 : vector<4x1xi32>
    %26 = arith.andi %23, %25 : vector<4x1xi1>
    %27 = arith.extui %26 : vector<4x1xi1> to vector<4x1xi32>
    %28 = arith.sitofp %27 : vector<4x1xi32> to vector<4x1xf32>
    %29 = arith.mulf %28, %16 : vector<4x1xf32>
    %cst_11 = arith.constant 1.000000e+01 : f32
    %30 = vector.broadcast %cst_11 : f32 to vector<4x1xf32>
    %31 = arith.subf %30, %28 : vector<4x1xf32>
    %32 = arith.mulf %31, %20 : vector<4x1xf32>
    %33 = arith.addf %29, %32 : vector<4x1xf32>
    %34 = vector.shape_cast %33 : vector<4x1xf32> to vector<1x4x1xf32>
    %cst_12 = arith.constant dense<0.000000e+00> : vector<1xf32>
    %35 = vector.multi_reduction <add>, %34, %cst_12 [1, 2] : vector<1x4x1xf32> to vector<1xf32>
    %36 = vector.shape_cast %35 : vector<1xf32> to vector<1x1x1xf32>
    %37 = vector.extract %36[0, 0, 0] : f32 from vector<1x1x1xf32>
    %38 = vector.broadcast %37 : f32 to vector<1x1x128xf32>
    %c0_13 = arith.constant 0 : index
    %c0_14 = arith.constant 0 : index
    %c0_15 = arith.constant 0 : index
    %39 = vector.load %arg4[%c0_13, %c0_14, %c0_15] : memref<1x1x128xf32, #tpu.memory_space<vmem>>, vector<1x1x128xf32>
    tpu.vector_store %arg4[%c0_13, %c0_14, %c0_15], %38 {strides = array<i32>} : memref<1x1x128xf32, #tpu.memory_space<vmem>>, vector<1x1x128xf32>,
    return
  }
  func.func @transform_0(%arg0: i32) -> (i32, i32) {
    %c0_i32 = arith.constant 0 : i32
    %c0_i32_0 = arith.constant 0 : i32
    return %arg0, %c0_i32 : i32, i32
  }
  func.func @transform_1(%arg0: i32) -> (i32, i32) {
    %c0_i32 = arith.constant 0 : i32
    %c0_i32_0 = arith.constant 0 : i32
    %c0_i32_1 = arith.constant 0 : i32
    return %c0_i32, %c0_i32_0 : i32, i32
  }
  func.func @transform_2(%arg0: i32) -> (i32, i32) {
    %c0_i32 = arith.constant 0 : i32
    %c0_i32_0 = arith.constant 0 : i32
    return %arg0, %c0_i32 : i32, i32
  }
  func.func @transform_3(%arg0: i32) -> (i32, i32, i32) {
    %c0_i32 = arith.constant 0 : i32
    %c0_i32_0 = arith.constant 0 : i32
    %c0_i32_1 = arith.constant 0 : i32
    return %arg0, %c0_i32, %c0_i32_0 : i32, i32, i32
  }
}

</mosaic_0001>

<llo_original>
// kernel: tpu_custom_call.1
$region0: #{tpu_custom_call.1}
  #allocation0 [shape = 'u32[]', space=smem, size = 0x4, offset = 0x4, fixed_abs, tag = 'smem constant byte address 0x4 - core index']
  #allocation1 [shape = 'u32[144,128]{1,0:T(1,128)}', space=vmem, size = 0x12000, scoped, tag = 'internal scratch']
  %s0 = inlined_call_operand.vmem [shape: f32[4,32], index: 0, kind: input, shape index: {}]
  %s1 = inlined_call_operand.vmem [shape: f32[2,32], index: 1, kind: input, shape index: {}]
  %s2 = inlined_call_operand.vmem [shape: s32[4,1], index: 2, kind: input, shape index: {}]
  %s3 = inlined_call_operand.hbm [shape: f32[1,1,128], index: 3, kind: output, shape index: {}]
  %s4 = sld [smem:[#allocation0]]
  $region22: #{tpu_custom_call.1} parent=0
    _
  %s6 = ssub.s32 1, %s4
  %s7 = scalar_select 0, %s6, %s4
  $region1: #{tpu_custom_call.1} parent=0
    #allocation2 [shape = 'u8[512]{0}', space=vmem, size = 0x400, scoped, tag = 'output window, operand 0, single buffered']
    #allocation3 [shape = 's32[1]{0}', space=sflag, size = 0x4, scoped, tag = 'scoped memory for tpu_custom_call.1']
    %8 = vsyncpa [#allocation3], 0
    // Predicated region
    $region2: #{tpu_custom_call.1} parent=1 // pred_check
      _
    $region3: #{tpu_custom_call.1} parent=1 // pred_check_branch
      %10 = sbr.rel (0) target = $region5
    $region4: #{tpu_custom_call.1} parent=1 // pred_region
      _
    $region5: #{tpu_custom_call.1} parent=1 // pred_fallthru
      _
    // Predicated region
    $region6: #{tpu_custom_call.1} parent=1 // pred_check
      _
    $region7: #{tpu_custom_call.1} parent=1 // pred_check_branch
      %12 = sbr.rel (0) target = $region9
    $region8: #{tpu_custom_call.1} parent=1 // pred_region
      _
    $region9: #{tpu_custom_call.1} parent=1 // pred_fallthru
      _
    // Predicated region
    $region10: #{tpu_custom_call.1} parent=1 // pred_check
      _
    $region11: #{tpu_custom_call.1} parent=1 // pred_check_branch
      %14 = sbr.rel (0) target = $region13
    $region12: #{tpu_custom_call.1} parent=1 // pred_region
      _
    $region13: #{tpu_custom_call.1} parent=1 // pred_fallthru
      _
    %v15 = vld [vmem:[%s0] sm:$0xf]
    %v16 = vld [vmem:[%s1] sm:$0x1]
    %v17 = vld [vmem:[%s1 + $0x1] sm:$0x1]
    %v18 = vlaneseq
    %v19 = vshrl.u32 %v18, 7
    %v20 = vsub.s32 0, %v19
    %v21 = vrot.slane %v16, %v20
    %v22 = vsub.f32 %v15, %v21
    %v23 = vmul.f32 %v22, %v22
    %vm24 = vcmask 257024
    %v25 = vsel %vm24, %v23, 0.0
    %26 = vadd.xlane.f32.xlu0 %v25
    %v27 = vpop.xlane.xlu0 %26
    %v28 = vlaneseq
    %v29 = vshrl.u32 %v28, 7
    %v30 = vsub.s32 0, %v29
    %v31 = vrot.slane %v17, %v30
    %v32 = vsub.f32 %v15, %v31
    %v33 = vmul.f32 %v32, %v32
    %v34 = vsel %vm24, %v33, 0.0
    %35 = vadd.xlane.f32.xlu0 %v34
    %v36 = vpop.xlane.xlu0 %35
    %v37 = vmax.f32 %v27, 1e-12
    %v38 = vmin.f32 %v37, 1e+12
    %v39 = vmax.f32 %v36, 1e-12
    %v40 = vmin.f32 %v39, 1e+12
    %v41 = vld [vmem:[%s2] sm:$0xf]
    %vm42 = vcmp.ge.s32.totalorder %v41, 0
    %vm43 = vcmp.lt.s32.totalorder %v41, 10
    %vm44 = vmand %vm42, %vm43
    %v45 = vsel %vm44, 1, 0
    %v46 = vcvt.s32.f32 %v45
    %v47 = vmul.f32 %v46, %v38
    %v48 = vsub.f32 10.0, %v46
    %v49 = vmul.f32 %v48, %v40
    %v50 = vadd.f32 %v47, %v49
    %vm51 = vcmask 3072
    %v52 = vsel %vm51, %v50, 0.0
    %53 = vadd.xlane.f32.xlu0 %v52
    %v54 = vpop.xlane.xlu0 %53
    %v55 = vrot.slane %v54, 4
    %v56 = vadd.f32 %v54, %v55
    %v57 = vrot.slane %v56, 2
    %v58 = vadd.f32 %v56, %v57
    %v59 = vrot.slane %v58, 1
    %v60 = vadd.f32 %v58, %v59
    %s61 = vtos %v60
    %v62 = vstv %s61
    %63 = vst [vmem:[#allocation2] sm:$0x1] %v62
    // Predicated region
    $region14: #{tpu_custom_call.1} parent=1 // pred_check
      _
    $region15: #{tpu_custom_call.1} parent=1 // pred_check_branch
      %65 = sbr.rel (0) target = $region17
    $region16: #{tpu_custom_call.1} parent=1 // pred_region
      %s67 = ssub.s32 16, 16
      %68 = vsyncadd [#allocation3], %s67
      %s70 = sshll.u32 [#allocation2], 4
      %s71 = int_to_ptr.vmem [resolvable:$true] %s70
      %73 = dma.vmem_to_hbm [thread:$0]  %s71, 16, %s3, [#allocation3]
    $region17: #{tpu_custom_call.1} parent=1 // pred_fallthru
      _
    // Predicated region
    $region18: #{tpu_custom_call.1} parent=1 // pred_check
      _
    $region19: #{tpu_custom_call.1} parent=1 // pred_check_branch
      %75 = sbr.rel (0) target = $region21
    $region20: #{tpu_custom_call.1} parent=1 // pred_region
      %76 = dma.done [#allocation3], 16
    $region21: #{tpu_custom_call.1} parent=1 // pred_fallthru
      _
    %77 = vsyncpa [#allocation3], 1

</llo_original>
